<compile_context>
chip_gen: v7x
topology: tpu7x:2x2x1
jax: 0.10.0
libtpu: 0.0.40
codegen_flags: <defaults>
</compile_context>

<pallas_src>
import dataclasses
import math

import jax
import jax.numpy as jnp
from jax.experimental import pallas as pl
from jax.experimental.pallas import tpu as pltpu


_VMEM_BUDGET = 12 * 1024 * 1024   # conservative: fits v5e's 16 MiB scoped default
_MAX_TK = 2048
_MAX_TM = 256


def _round_up(x, m):
    return (x + m - 1) // m * m


def _cdiv(a, b):
    return (a + b - 1) // b


def _balanced_split(dim_aligned, max_tile, align):
    """Split an `align`-multiple dim into near-equal `align`-multiple tiles
    <= max_tile, minimizing total padding.  Returns (tile, grid, padded_dim)."""
    max_tile = max(align, (max_tile // align) * align)
    if dim_aligned <= max_tile:
        return dim_aligned, 1, dim_aligned
    g0 = _cdiv(dim_aligned, max_tile)
    g_hi = max(g0, min(g0 + 3, dim_aligned // align))
    best = None
    for g in range(g0, g_hi + 1):
        t = _round_up(_cdiv(dim_aligned, g), align)
        waste = g * t - dim_aligned
        if best is None or waste < best[0]:
            best = (waste, t, g)
        if waste == 0:
            break
    _, t, g = best
    return t, g, g * t


def _choose_kn_tiles(K, N, w_bytes, *, max_tk=_MAX_TK):
    """Pick (tn, N_pad) and (tk, K_pad).  Independent of M (budgeted with the
    max tm) so init-time weight padding and per-call tiling always agree."""
    K_128 = _round_up(K, 128)
    N_128 = _round_up(N, 128)
    tm_budget = _MAX_TM
    x_bytes = 4  # x streamed as f32, cast to weight dtype inside the kernel

    def tk_under_budget(tn):
        fixed = 2 * tm_budget * tn * 4 + 2 * tn * 4          # output (x2) + bias
        per_tk = 2 * (tm_budget * x_bytes + tn * w_bytes)     # x tile + w tile, x2 buffers
        cap = (_VMEM_BUDGET - fixed) // per_tk
        return max((cap // 128) * 128, 0)

    # Prefer a single lane-dense N block: weight streamed exactly once,
    # x / output never re-fetched per j.
    tn, grid_n, N_pad = N_128, 1, N_128
    tk_cap = tk_under_budget(tn)
    if tk_cap < 512 and N_128 > 512:
        # Very wide token_dim: split N into balanced ~512-wide tiles instead.
        tn, grid_n, N_pad = _balanced_split(N_128, 512, 128)
        tk_cap = tk_under_budget(tn)
    tk_cap = max(min(tk_cap, max_tk), 128)

    tk, grid_k, K_pad = _balanced_split(K_128, tk_cap, 128)
    return (tn, grid_n, N_pad), (tk, grid_k, K_pad)


# ---------------------------------------------------------------------------
# Kernels (f32 accumulation; x cast to the streamed weight dtype in-kernel)
# ---------------------------------------------------------------------------
def _proj_kernel_single(x_ref, w_ref, b_ref, o_ref):
    """Whole-K block: one MXU matmul + bias.  No scratch, no pl.when."""
    x = x_ref[...].astype(w_ref.dtype)
    o_ref[...] = (
        jnp.dot(x, w_ref[...], preferred_element_type=jnp.float32) + b_ref[...]
    )


def _proj_kernel_kred(x_ref, w_ref, b_ref, o_ref):
    """K-reduction: accumulate into the resident f32 output tile; bias folded
    into the k == 0 init (output block index is k-invariant)."""
    k = pl.program_id(2)

    @pl.when(k == 0)
    def _():
        o_ref[...] = jnp.broadcast_to(b_ref[...], o_ref.shape)

    x = x_ref[...].astype(w_ref.dtype)
    o_ref[...] += jnp.dot(x, w_ref[...], preferred_element_type=jnp.float32)


# ---------------------------------------------------------------------------
# Parameters: padded + cast once at init (free per forward call)
# ---------------------------------------------------------------------------
@dataclasses.dataclass(frozen=True)
class VideoTokenEmbedParams:
    w_pad: jax.Array     # (K_pad, N_pad), weight_dtype
    b_pad: jax.Array     # (1, N_pad), float32
    in_features: int     # K = C*H*W
    token_dim: int       # N
    tk: int
    tn: int


def prepare_params(weight, bias, *, weight_dtype=jnp.bfloat16, max_tk=_MAX_TK):
    """weight: (token_dim, K) as in nn.Linear; bias: (token_dim,)."""
    N, K = weight.shape
    w_bytes = jnp.dtype(weight_dtype).itemsize
    (tn, _, N_pad), (tk, _, K_pad) = _choose_kn_tiles(K, N, w_bytes, max_tk=max_tk)

    w_t = jnp.transpose(weight).astype(weight_dtype)          # (K, N)
    if K_pad != K or N_pad != N:
        w_t = jnp.pad(w_t, ((0, K_pad - K), (0, N_pad - N)))  # zeros: exact
    b2d = bias.astype(jnp.float32).reshape(1, N)
    if N_pad != N:
        b2d = jnp.pad(b2d, ((0, 0), (0, N_pad - N)))
    return VideoTokenEmbedParams(w_pad=w_t, b_pad=b2d, in_features=K,
                                 token_dim=N, tk=tk, tn=tn)


# ---------------------------------------------------------------------------
# Forward
# ---------------------------------------------------------------------------
def _choose_m_tile(M, max_tm=_MAX_TM):
    M_8 = _round_up(M, 8)
    return _balanced_split(M_8, max_tm, 8)


def video_token_embed(x, params: VideoTokenEmbedParams):
    """x: (B, T, C, H, W) float32 -> (B, T, token_dim) float32."""
    B, T, C, H, W = x.shape
    K = C * H * W
    assert K == params.in_features, (K, params.in_features)
    N = params.token_dim
    M = B * T

    # Same memory ordering as torch .view(B*T, C, H, W).flatten(1) on NCHW.
    x2d = x.reshape(M, K)

    K_pad, N_pad = params.w_pad.shape
    tk, tn = params.tk, params.tn
    tm, grid_m, M_pad = _choose_m_tile(M)
    grid_n = N_pad // tn
    grid_k = K_pad // tk

    # Only x (tiny vs the weight) is padded per call; zeros are exact.
    if M_pad != M or K_pad != K:
        x2d = jnp.pad(x2d, ((0, M_pad - M), (0, K_pad - K)))

    if grid_k == 1:
        kernel = _proj_kernel_single
        grid = (grid_m, grid_n)
        in_specs = [
            pl.BlockSpec((tm, K_pad), lambda i, j: (i, 0)),
            pl.BlockSpec((K_pad, tn), lambda i, j: (0, j)),
            pl.BlockSpec((1, tn), lambda i, j: (0, j)),
        ]
        out_spec = pl.BlockSpec((tm, tn), lambda i, j: (i, j))
        sem = ("parallel", "parallel")
    else:
        kernel = _proj_kernel_kred
        grid = (grid_m, grid_n, grid_k)
        in_specs = [
            pl.BlockSpec((tm, tk), lambda i, j, k: (i, k)),
            pl.BlockSpec((tk, tn), lambda i, j, k: (k, j)),
            pl.BlockSpec((1, tn), lambda i, j, k: (0, j)),
        ]
        out_spec = pl.BlockSpec((tm, tn), lambda i, j, k: (i, j))
        sem = ("parallel", "parallel", "arbitrary")

    out = pl.pallas_call(
        kernel,
        out_shape=jax.ShapeDtypeStruct((M_pad, N_pad), jnp.float32),
        grid=grid,
        in_specs=in_specs,
        out_specs=out_spec,
        compiler_params=pltpu.CompilerParams(dimension_semantics=sem),
    )(x2d, params.w_pad, params.b_pad)

    if M_pad != M or N_pad != N:
        out = out[:M, :N]
    return out.reshape(B, T, N)


# ---------------------------------------------------------------------------
# Self-test
# ---------------------------------------------------------------------------
if __name__ == "__main__":
    # Scaled-down shapes consistent with the module's forward:
    #   C=4, H=8, W=16 -> K = C*H*W = 512; token_dim = 256; B=2, T=8 -> M = 16.
    B, T, C, H, W = 2, 8, 4, 8, 16
    token_dim = 256
    K = C * H * W

    key = jax.random.PRNGKey(0)
    kx, kw, kb = jax.random.split(key, 3)
    bound = 1.0 / math.sqrt(K)
    weight = jax.random.uniform(kw, (token_dim, K), jnp.float32, -bound, bound)
    bias = jax.random.uniform(kb, (token_dim,), jnp.float32, -bound, bound)
    x = jax.random.normal(kx, (B, T, C, H, W), jnp.float32)

    # Pure-JAX f32 reference of the exact PyTorch forward.
    ref = (
        jnp.dot(x.reshape(B * T, K), weight.T, precision=jax.lax.Precision.HIGHEST)
        + bias
    ).reshape(B, T, token_dim)

    # 1) Default path: bf16 weights pre-padded at init, single K block.
    params = prepare_params(weight, bias)
    out = jax.block_until_ready(video_token_embed(x, params))
    assert out.shape == (B, T, token_dim)
    assert jnp.allclose(out, ref, atol=7e-2, rtol=3e-2), "bf16 single-block mismatch"

    # 2) f32 weights, DEFAULT precision (HIGHEST dropped per perf review).
    params_f32 = prepare_params(weight, bias, weight_dtype=jnp.float32)
    out_f32 = jax.block_until_ready(video_token_embed(x, params_f32))
    assert jnp.allclose(out_f32, ref, atol=2e-2, rtol=2e-2), "f32 path mismatch"

    # 3) Forced K-reduction path (max_tk=128 -> grid_k=4): exercises the
    #    resident-accumulator kernel used at production K (= 5*32*64 = 10240).
    params_k = prepare_params(weight, bias, max_tk=128)
    out_k = jax.block_until_ready(video_token_embed(x, params_k))
    assert jnp.allclose(out_k, ref, atol=7e-2, rtol=3e-2), "k-reduction mismatch"

    print("KERNEL_OK")
</pallas_src>

<mosaic_0001>
module attributes {stable_mosaic.version = 11 : i64} {
  func.func @_proj_kernel_single(%arg0: i32, %arg1: i32, %arg2: memref<16x512xf32, #tpu.memory_space<vmem>>, %arg3: memref<512x256xbf16, #tpu.memory_space<vmem>>, %arg4: memref<1x256xf32, #tpu.memory_space<vmem>>, %arg5: memref<16x256xf32, #tpu.memory_space<vmem>>) attributes {dimension_semantics = [#tpu.dimension_semantics<parallel>, #tpu.dimension_semantics<parallel>], iteration_bounds = array<i64: 1, 1>, scalar_prefetch = 0 : i64, scratch_operands = 0 : i64, tpu.core_type = #tpu.core_type<tc>, window_params = [{transform_indices = @transform_0, window_bounds = array<i64: 16, 512>}, {transform_indices = @transform_1, window_bounds = array<i64: 512, 256>}, {transform_indices = @transform_2, window_bounds = array<i64: 1, 256>}, {transform_indices = @transform_3, window_bounds = array<i64: 16, 256>}]} {
    %c0 = arith.constant 0 : index
    %c0_0 = arith.constant 0 : index
    %0 = vector.load %arg2[%c0, %c0_0] : memref<16x512xf32, #tpu.memory_space<vmem>>, vector<16x512xf32>
    %1 = arith.truncf %0 : vector<16x512xf32> to vector<16x512xbf16>
    %c0_1 = arith.constant 0 : index
    %c0_2 = arith.constant 0 : index
    %2 = vector.load %arg3[%c0_1, %c0_2] : memref<512x256xbf16, #tpu.memory_space<vmem>>, vector<512x256xbf16>
    %cst = arith.constant dense<0.000000e+00> : vector<16x256xf32>
    %3 = tpu.matmul %1, %2, %cst {dimension_numbers = #tpu.dot_dimension_numbers<[1], [0], [0], [1], [0, 0, 1, 1], [], []>} : vector<16x512xbf16>, vector<512x256xbf16>, vector<16x256xf32> -> vector<16x256xf32>
    %c0_3 = arith.constant 0 : index
    %c0_4 = arith.constant 0 : index
    %4 = vector.load %arg4[%c0_3, %c0_4] : memref<1x256xf32, #tpu.memory_space<vmem>>, vector<1x256xf32>
    %5 = vector.broadcast %4 : vector<1x256xf32> to vector<16x256xf32>
    %6 = arith.addf %3, %5 : vector<16x256xf32>
    %c0_5 = arith.constant 0 : index
    %c0_6 = arith.constant 0 : index
    %7 = vector.load %arg5[%c0_5, %c0_6] : memref<16x256xf32, #tpu.memory_space<vmem>>, vector<16x256xf32>
    tpu.vector_store %arg5[%c0_5, %c0_6], %6 {strides = array<i32>} : memref<16x256xf32, #tpu.memory_space<vmem>>, vector<16x256xf32>,
    return
  }
  func.func @transform_0(%arg0: i32, %arg1: i32) -> (i32, i32) {
    %c0_i32 = arith.constant 0 : i32
    %c0_i32_0 = arith.constant 0 : i32
    return %arg0, %c0_i32 : i32, i32
  }
  func.func @transform_1(%arg0: i32, %arg1: i32) -> (i32, i32) {
    %c0_i32 = arith.constant 0 : i32
    %c0_i32_0 = arith.constant 0 : i32
    return %c0_i32, %arg1 : i32, i32
  }
  func.func @transform_2(%arg0: i32, %arg1: i32) -> (i32, i32) {
    %c0_i32 = arith.constant 0 : i32
    %c0_i32_0 = arith.constant 0 : i32
    return %c0_i32, %arg1 : i32, i32
  }
  func.func @transform_3(%arg0: i32, %arg1: i32) -> (i32, i32) {
    %c0_i32 = arith.constant 0 : i32
    return %arg0, %arg1 : i32, i32
  }
}

</mosaic_0001>

<llo_original>
// kernel: tpu_custom_call.1
$region0: #{tpu_custom_call.1}
  #allocation0 [shape = 'u32[]', space=smem, size = 0x4, offset = 0x4, fixed_abs, tag = 'smem constant byte address 0x4 - core index']
  #allocation1 [shape = 'u32[144,128]{1,0:T(1,128)}', space=vmem, size = 0x12000, scoped, tag = 'internal scratch']
  %s0 = inlined_call_operand.hbm [shape: f32[16,512], index: 0, kind: input, shape index: {}]
  %s1 = inlined_call_operand.hbm [shape: bf16[512,256], index: 1, kind: input, shape index: {}]
  %s2 = inlined_call_operand.vmem [shape: f32[1,256], index: 2, kind: input, shape index: {}]
  %s3 = inlined_call_operand.hbm [shape: f32[16,256], index: 3, kind: output, shape index: {}]
  %s4 = sld [smem:[#allocation0]]
  $region30: #{tpu_custom_call.1} parent=0
    _
  %s6 = ssub.s32 1, %s4
  %s7 = scalar_select 0, %s6, %s4
  $region1: #{tpu_custom_call.1} parent=0
    #allocation2 [shape = 'u8[32768]{0}', space=vmem, size = 0x8000, scoped, tag = 'input window, operand 0, single buffered']
    #allocation3 [shape = 's32[1]{0}', space=sflag, size = 0x4, scoped, tag = 'scoped memory for tpu_custom_call.1']
    #allocation4 [shape = 's32[1]{0}', space=sflag, size = 0x4, scoped, tag = 'scoped memory for tpu_custom_call.1']
    #allocation5 [shape = 'u8[262144]{0}', space=vmem, size = 0x40000, scoped, tag = 'input window, operand 1, single buffered']
    #allocation6 [shape = 's32[1]{0}', space=sflag, size = 0x4, scoped, tag = 'scoped memory for tpu_custom_call.1']
    #allocation7 [shape = 'u8[16384]{0}', space=vmem, size = 0x4000, scoped, tag = 'output window, operand 0, single buffered']
    %8 = vsyncpa [#allocation3], 0
    %9 = vsyncpa [#allocation6], 0
    %10 = vsyncpa [#allocation4], 0
    // Predicated region
    $region2: #{tpu_custom_call.1} parent=1 // pred_check
      _
    $region3: #{tpu_custom_call.1} parent=1 // pred_check_branch
      %12 = sbr.rel (0) target = $region5
    $region4: #{tpu_custom_call.1} parent=1 // pred_region
      %s14 = ssub.s32 1024, 1024
      %15 = vsyncadd [#allocation3], %s14
      %s16 = sshll.u32 [#allocation2], 4
      %s17 = int_to_ptr.vmem [resolvable:$true] %s16
      %22 = dma.hbm_to_vmem [thread:$0]  %s0, 1024, %s17, [#allocation3], 512, 512, 32
    $region5: #{tpu_custom_call.1} parent=1 // pred_fallthru
      _
    // Predicated region
    $region6: #{tpu_custom_call.1} parent=1 // pred_check
      _
    $region7: #{tpu_custom_call.1} parent=1 // pred_check_branch
      %24 = sbr.rel (0) target = $region9
    $region8: #{tpu_custom_call.1} parent=1 // pred_region
      %s26 = ssub.s32 8192, 8192
      %27 = vsyncadd [#allocation6], %s26
      %s28 = sshll.u32 [#allocation5], 4
      %s29 = int_to_ptr.vmem [resolvable:$true] %s28
      %34 = dma.hbm_to_vmem [thread:$0]  %s1, 8192, %s29, [#allocation6], 128, 128, 8
    $region9: #{tpu_custom_call.1} parent=1 // pred_fallthru
      _
    // Predicated region
    $region10: #{tpu_custom_call.1} parent=1 // pred_check
      _
    $region11: #{tpu_custom_call.1} parent=1 // pred_check_branch
      %36 = sbr.rel (0) target = $region13
    $region12: #{tpu_custom_call.1} parent=1 // pred_region
      _
    $region13: #{tpu_custom_call.1} parent=1 // pred_fallthru
      _
    // Predicated region
    $region14: #{tpu_custom_call.1} parent=1 // pred_check
      _
    $region15: #{tpu_custom_call.1} parent=1 // pred_check_branch
      %38 = sbr.rel (0) target = $region17
    $region16: #{tpu_custom_call.1} parent=1 // pred_region
      %39 = dma.done [#allocation3], 1024
    $region17: #{tpu_custom_call.1} parent=1 // pred_fallthru
      _
    // Predicated region
    $region18: #{tpu_custom_call.1} parent=1 // pred_check
      _
    $region19: #{tpu_custom_call.1} parent=1 // pred_check_branch
      %41 = sbr.rel (0) target = $region21
    $region20: #{tpu_custom_call.1} parent=1 // pred_region
      %42 = dma.done [#allocation6], 8192
    $region21: #{tpu_custom_call.1} parent=1 // pred_fallthru
      _
    %v43 = vld [vmem:[#allocation2] sm:$0xff]
    %v44 = vld [vmem:[#allocation2 + $0x8] sm:$0xff]
    %v45 = vld [vmem:[#allocation2 + $0x10] sm:$0xff]
    %v46 = vld [vmem:[#allocation2 + $0x18] sm:$0xff]
    %v47 = vld [vmem:[#allocation2 + $0x20] sm:$0xff]
    %v48 = vld [vmem:[#allocation2 + $0x28] sm:$0xff]
    %v49 = vld [vmem:[#allocation2 + $0x30] sm:$0xff]
    %v50 = vld [vmem:[#allocation2 + $0x38] sm:$0xff]
    %v51 = vpack.c.bf16 %v47, %v43
    %v52 = vpack.c.bf16 %v48, %v44
    %v53 = vpack.c.bf16 %v49, %v45
    %v54 = vpack.c.bf16 %v50, %v46
    %v55 = vld [vmem:[#allocation5] sm:$0xff]
    %v56 = vld [vmem:[#allocation5 + $0x8] sm:$0xff]
    %v57 = vld [vmem:[#allocation5 + $0x10] sm:$0xff]
    %v58 = vld [vmem:[#allocation5 + $0x18] sm:$0xff]
    %v59 = vld [vmem:[#allocation5 + $0x20] sm:$0xff]
    %v60 = vld [vmem:[#allocation5 + $0x28] sm:$0xff]
    %v61 = vld [vmem:[#allocation5 + $0x30] sm:$0xff]
    %v62 = vld [vmem:[#allocation5 + $0x38] sm:$0xff]
    %v63 = vld [vmem:[#allocation5 + $0x40] sm:$0xff]
    %v64 = vld [vmem:[#allocation5 + $0x48] sm:$0xff]
    %v65 = vld [vmem:[#allocation5 + $0x50] sm:$0xff]
    %v66 = vld [vmem:[#allocation5 + $0x58] sm:$0xff]
    %v67 = vld [vmem:[#allocation5 + $0x60] sm:$0xff]
    %v68 = vld [vmem:[#allocation5 + $0x68] sm:$0xff]
    %v69 = vld [vmem:[#allocation5 + $0x70] sm:$0xff]
    %v70 = vld [vmem:[#allocation5 + $0x78] sm:$0xff]
    %v71 = vld [vmem:[#allocation5 + $0x80] sm:$0xff]
    %v72 = vld [vmem:[#allocation5 + $0x88] sm:$0xff]
    %v73 = vld [vmem:[#allocation5 + $0x90] sm:$0xff]
    %v74 = vld [vmem:[#allocation5 + $0x98] sm:$0xff]
    %v75 = vld [vmem:[#allocation5 + $0xa0] sm:$0xff]
    %v76 = vld [vmem:[#allocation5 + $0xa8] sm:$0xff]
    %v77 = vld [vmem:[#allocation5 + $0xb0] sm:$0xff]
    %v78 = vld [vmem:[#allocation5 + $0xb8] sm:$0xff]
    %v79 = vld [vmem:[#allocation5 + $0xc0] sm:$0xff]
    %v80 = vld [vmem:[#allocation5 + $0xc8] sm:$0xff]
    %v81 = vld [vmem:[#allocation5 + $0xd0] sm:$0xff]
    %v82 = vld [vmem:[#allocation5 + $0xd8] sm:$0xff]
    %v83 = vld [vmem:[#allocation5 + $0xe0] sm:$0xff]
    %v84 = vld [vmem:[#allocation5 + $0xe8] sm:$0xff]
    %v85 = vld [vmem:[#allocation5 + $0xf0] sm:$0xff]
    %v86 = vld [vmem:[#allocation5 + $0xf8] sm:$0xff]
    %v87 = vld [vmem:[#allocation5 + $0x100] sm:$0xff]
    %v88 = vld [vmem:[#allocation5 + $0x108] sm:$0xff]
    %v89 = vld [vmem:[#allocation5 + $0x110] sm:$0xff]
    %v90 = vld [vmem:[#allocation5 + $0x118] sm:$0xff]
    %v91 = vld [vmem:[#allocation5 + $0x120] sm:$0xff]
    %v92 = vld [vmem:[#allocation5 + $0x128] sm:$0xff]
    %v93 = vld [vmem:[#allocation5 + $0x130] sm:$0xff]
    %v94 = vld [vmem:[#allocation5 + $0x138] sm:$0xff]
    %v95 = vld [vmem:[#allocation5 + $0x140] sm:$0xff]
    %v96 = vld [vmem:[#allocation5 + $0x148] sm:$0xff]
    %v97 = vld [vmem:[#allocation5 + $0x150] sm:$0xff]
    %v98 = vld [vmem:[#allocation5 + $0x158] sm:$0xff]
    %v99 = vld [vmem:[#allocation5 + $0x160] sm:$0xff]
    %v100 = vld [vmem:[#allocation5 + $0x168] sm:$0xff]
    %v101 = vld [vmem:[#allocation5 + $0x170] sm:$0xff]
    %v102 = vld [vmem:[#allocation5 + $0x178] sm:$0xff]
    %v103 = vld [vmem:[#allocation5 + $0x180] sm:$0xff]
    %v104 = vld [vmem:[#allocation5 + $0x188] sm:$0xff]
    %v105 = vld [vmem:[#allocation5 + $0x190] sm:$0xff]
    %v106 = vld [vmem:[#allocation5 + $0x198] sm:$0xff]
    %v107 = vld [vmem:[#allocation5 + $0x1a0] sm:$0xff]
    %v108 = vld [vmem:[#allocation5 + $0x1a8] sm:$0xff]
    %v109 = vld [vmem:[#allocation5 + $0x1b0] sm:$0xff]
    %v110 = vld [vmem:[#allocation5 + $0x1b8] sm:$0xff]
    %v111 = vld [vmem:[#allocation5 + $0x1c0] sm:$0xff]
    %v112 = vld [vmem:[#allocation5 + $0x1c8] sm:$0xff]
    %v113 = vld [vmem:[#allocation5 + $0x1d0] sm:$0xff]
    %v114 = vld [vmem:[#allocation5 + $0x1d8] sm:$0xff]
    %v115 = vld [vmem:[#allocation5 + $0x1e0] sm:$0xff]
    %v116 = vld [vmem:[#allocation5 + $0x1e8] sm:$0xff]
    %v117 = vld [vmem:[#allocation5 + $0x1f0] sm:$0xff]
    %v118 = vld [vmem:[#allocation5 + $0x1f8] sm:$0xff]
    %v119 = vld [vmem:[%s2] sm:$0x3]
    %v121 = vlaneseq
    %v122 = vshrl.u32 %v121, 7
    %v123 = vsub.s32 0, %v122
    %v124 = vrot.slane %v119, %v123
    %v125 = vlaneseq
    %v126 = vshrl.u32 %v125, 7
    %v127 = vsub.s32 1, %v126
    %v128 = vrot.slane %v119, %v127
    %v195 = vunpack.c.l.b16 %v55
    %v196 = vunpack.c.h.b16 %v55
    %v197 = vunpack.c.l.b16 %v56
    %v198 = vunpack.c.h.b16 %v56
    %v199 = vunpack.c.l.b16 %v57
    %v200 = vunpack.c.h.b16 %v57
    %v201 = vunpack.c.l.b16 %v58
    %v202 = vunpack.c.h.b16 %v58
    %v203 = vunpack.c.l.b16 %v59
    %v204 = vunpack.c.h.b16 %v59
    %v205 = vunpack.c.l.b16 %v60
    %v206 = vunpack.c.h.b16 %v60
    %v207 = vunpack.c.l.b16 %v61
    %v208 = vunpack.c.h.b16 %v61
    %v209 = vunpack.c.l.b16 %v62
    %v210 = vunpack.c.h.b16 %v62
    %v211 = vunpack.c.l.b16 %v63
    %v212 = vunpack.c.h.b16 %v63
    %v213 = vunpack.c.l.b16 %v64
    %v214 = vunpack.c.h.b16 %v64
    %v215 = vunpack.c.l.b16 %v65
    %v216 = vunpack.c.h.b16 %v65
    %v217 = vunpack.c.l.b16 %v66
    %v218 = vunpack.c.h.b16 %v66
    %v219 = vunpack.c.l.b16 %v67
    %v220 = vunpack.c.h.b16 %v67
    %v221 = vunpack.c.l.b16 %v68
    %v222 = vunpack.c.h.b16 %v68
    %v223 = vunpack.c.l.b16 %v69
    %v224 = vunpack.c.h.b16 %v69
    %v225 = vunpack.c.l.b16 %v70
    %v226 = vunpack.c.h.b16 %v70
    %v227 = vunpack.c.l.b16 %v71
    %v228 = vunpack.c.h.b16 %v71
    %v229 = vunpack.c.l.b16 %v72
    %v230 = vunpack.c.h.b16 %v72
    %v231 = vunpack.c.l.b16 %v73
    %v232 = vunpack.c.h.b16 %v73
    %v233 = vunpack.c.l.b16 %v74
    %v234 = vunpack.c.h.b16 %v74
    %v235 = vunpack.c.l.b16 %v75
    %v236 = vunpack.c.h.b16 %v75
    %v237 = vunpack.c.l.b16 %v76
    %v238 = vunpack.c.h.b16 %v76
    %v239 = vunpack.c.l.b16 %v77
    %v240 = vunpack.c.h.b16 %v77
    %v241 = vunpack.c.l.b16 %v78
    %v242 = vunpack.c.h.b16 %v78
    %v243 = vunpack.c.l.b16 %v79
    %v244 = vunpack.c.h.b16 %v79
    %v245 = vunpack.c.l.b16 %v80
    %v246 = vunpack.c.h.b16 %v80
    %v247 = vunpack.c.l.b16 %v81
    %v248 = vunpack.c.h.b16 %v81
    %v249 = vunpack.c.l.b16 %v82
    %v250 = vunpack.c.h.b16 %v82
    %v251 = vunpack.c.l.b16 %v83
    %v252 = vunpack.c.h.b16 %v83
    %v253 = vunpack.c.l.b16 %v84
    %v254 = vunpack.c.h.b16 %v84
    %v255 = vunpack.c.l.b16 %v85
    %v256 = vunpack.c.h.b16 %v85
    %v257 = vunpack.c.l.b16 %v86
    %v258 = vunpack.c.h.b16 %v86
    %v259 = vunpack.c.l.b16 %v87
    %v260 = vunpack.c.h.b16 %v87
    %v261 = vunpack.c.l.b16 %v88
    %v262 = vunpack.c.h.b16 %v88
    %v263 = vunpack.c.l.b16 %v89
    %v264 = vunpack.c.h.b16 %v89
    %v265 = vunpack.c.l.b16 %v90
    %v266 = vunpack.c.h.b16 %v90
    %v267 = vunpack.c.l.b16 %v91
    %v268 = vunpack.c.h.b16 %v91
    %v269 = vunpack.c.l.b16 %v92
    %v270 = vunpack.c.h.b16 %v92
    %v271 = vunpack.c.l.b16 %v93
    %v272 = vunpack.c.h.b16 %v93
    %v273 = vunpack.c.l.b16 %v94
    %v274 = vunpack.c.h.b16 %v94
    %v275 = vunpack.c.l.b16 %v95
    %v276 = vunpack.c.h.b16 %v95
    %v277 = vunpack.c.l.b16 %v96
    %v278 = vunpack.c.h.b16 %v96
    %v279 = vunpack.c.l.b16 %v97
    %v280 = vunpack.c.h.b16 %v97
    %v281 = vunpack.c.l.b16 %v98
    %v282 = vunpack.c.h.b16 %v98
    %v283 = vunpack.c.l.b16 %v99
    %v284 = vunpack.c.h.b16 %v99
    %v285 = vunpack.c.l.b16 %v100
    %v286 = vunpack.c.h.b16 %v100
    %v287 = vunpack.c.l.b16 %v101
    %v288 = vunpack.c.h.b16 %v101
    %v289 = vunpack.c.l.b16 %v102
    %v290 = vunpack.c.h.b16 %v102
    %v291 = vunpack.c.l.b16 %v103
    %v292 = vunpack.c.h.b16 %v103
    %v293 = vunpack.c.l.b16 %v104
    %v294 = vunpack.c.h.b16 %v104
    %v295 = vunpack.c.l.b16 %v105
    %v296 = vunpack.c.h.b16 %v105
    %v297 = vunpack.c.l.b16 %v106
    %v298 = vunpack.c.h.b16 %v106
    %v299 = vunpack.c.l.b16 %v107
    %v300 = vunpack.c.h.b16 %v107
    %v301 = vunpack.c.l.b16 %v108
    %v302 = vunpack.c.h.b16 %v108
    %v303 = vunpack.c.l.b16 %v109
    %v304 = vunpack.c.h.b16 %v109
    %v305 = vunpack.c.l.b16 %v110
    %v306 = vunpack.c.h.b16 %v110
    %v307 = vunpack.c.l.b16 %v111
    %v308 = vunpack.c.h.b16 %v111
    %v309 = vunpack.c.l.b16 %v112
    %v310 = vunpack.c.h.b16 %v112
    %v311 = vunpack.c.l.b16 %v113
    %v312 = vunpack.c.h.b16 %v113
    %v313 = vunpack.c.l.b16 %v114
    %v314 = vunpack.c.h.b16 %v114
    %v315 = vunpack.c.l.b16 %v115
    %v316 = vunpack.c.h.b16 %v115
    %v317 = vunpack.c.l.b16 %v116
    %v318 = vunpack.c.h.b16 %v116
    %v319 = vunpack.c.l.b16 %v117
    %v320 = vunpack.c.h.b16 %v117
    %v321 = vunpack.c.l.b16 %v118
    %v322 = vunpack.c.h.b16 %v118
    %v323 = vpack.c.b16 %v197, %v195
    %v324 = vpack.c.b16 %v198, %v196
    %v325 = vpack.c.b16 %v201, %v199
    %v326 = vpack.c.b16 %v202, %v200
    %v327 = vpack.c.b16 %v205, %v203
    %v328 = vpack.c.b16 %v206, %v204
    %v329 = vpack.c.b16 %v209, %v207
    %v330 = vpack.c.b16 %v210, %v208
    %v331 = vpack.c.b16 %v213, %v211
    %v332 = vpack.c.b16 %v214, %v212
    %v333 = vpack.c.b16 %v217, %v215
    %v334 = vpack.c.b16 %v218, %v216
    %v335 = vpack.c.b16 %v221, %v219
    %v336 = vpack.c.b16 %v222, %v220
    %v337 = vpack.c.b16 %v225, %v223
    %v338 = vpack.c.b16 %v226, %v224
    %v339 = vpack.c.b16 %v229, %v227
    %v340 = vpack.c.b16 %v230, %v228
    %v341 = vpack.c.b16 %v233, %v231
    %v342 = vpack.c.b16 %v234, %v232
    %v343 = vpack.c.b16 %v237, %v235
    %v344 = vpack.c.b16 %v238, %v236
    %v345 = vpack.c.b16 %v241, %v239
    %v346 = vpack.c.b16 %v242, %v240
    %v347 = vpack.c.b16 %v245, %v243
    %v348 = vpack.c.b16 %v246, %v244
    %v349 = vpack.c.b16 %v249, %v247
    %v350 = vpack.c.b16 %v250, %v248
    %v351 = vpack.c.b16 %v253, %v251
    %v352 = vpack.c.b16 %v254, %v252
    %v353 = vpack.c.b16 %v257, %v255
    %v354 = vpack.c.b16 %v258, %v256
    %v355 = vpack.c.b16 %v261, %v259
    %v356 = vpack.c.b16 %v262, %v260
    %v357 = vpack.c.b16 %v265, %v263
    %v358 = vpack.c.b16 %v266, %v264
    %v359 = vpack.c.b16 %v269, %v267
    %v360 = vpack.c.b16 %v270, %v268
    %v361 = vpack.c.b16 %v273, %v271
    %v362 = vpack.c.b16 %v274, %v272
    %v363 = vpack.c.b16 %v277, %v275
    %v364 = vpack.c.b16 %v278, %v276
    %v365 = vpack.c.b16 %v281, %v279
    %v366 = vpack.c.b16 %v282, %v280
    %v367 = vpack.c.b16 %v285, %v283
    %v368 = vpack.c.b16 %v286, %v284
    %v369 = vpack.c.b16 %v289, %v287
    %v370 = vpack.c.b16 %v290, %v288
    %v371 = vpack.c.b16 %v293, %v291
    %v372 = vpack.c.b16 %v294, %v292
    %v373 = vpack.c.b16 %v297, %v295
    %v374 = vpack.c.b16 %v298, %v296
    %v375 = vpack.c.b16 %v301, %v299
    %v376 = vpack.c.b16 %v302, %v300
    %v377 = vpack.c.b16 %v305, %v303
    %v378 = vpack.c.b16 %v306, %v304
    %v379 = vpack.c.b16 %v309, %v307
    %v380 = vpack.c.b16 %v310, %v308
    %v381 = vpack.c.b16 %v313, %v311
    %v382 = vpack.c.b16 %v314, %v312
    %v383 = vpack.c.b16 %v317, %v315
    %v384 = vpack.c.b16 %v318, %v316
    %v385 = vpack.c.b16 %v321, %v319
    %v386 = vpack.c.b16 %v322, %v320
    %451 = vmatprep.subr.bf16.mxu0 %v324
    %452 = vmatpush1.bf16.msra.mxu0 %v323
    %453 = vmatprep.subr.bf16.mxu0 %v326
    %454 = vmatpush1.bf16.msra.mxu0 %v325
    %455 = vmatprep.subr.bf16.mxu0 %v328
    %456 = vmatpush1.bf16.msra.mxu0 %v327
    %457 = vmatprep.subr.bf16.mxu0 %v330
    %458 = vmatpush1.bf16.msra.mxu0 %v329
    %459 = vmatprep.subr.bf16.mxu0 %v332
    %460 = vmatpush1.bf16.msra.mxu0 %v331
    %461 = vmatprep.subr.bf16.mxu0 %v334
    %462 = vmatpush1.bf16.msra.mxu0 %v333
    %463 = vmatprep.subr.bf16.mxu0 %v336
    %464 = vmatpush1.bf16.msra.mxu0 %v335
    %465 = vmatprep.subr.bf16.mxu0 %v338
    %466 = vmatpush1.bf16.msra.mxu0 %v337
    %467 = vmatprep.subr.bf16.mxu0 %v340
    %468 = vmatpush1.bf16.msra.mxu0 %v339
    %469 = vmatprep.subr.bf16.mxu0 %v342
    %470 = vmatpush1.bf16.msra.mxu0 %v341
    %471 = vmatprep.subr.bf16.mxu0 %v344
    %472 = vmatpush1.bf16.msra.mxu0 %v343
    %473 = vmatprep.subr.bf16.mxu0 %v346
    %474 = vmatpush1.bf16.msra.mxu0 %v345
    %475 = vmatprep.subr.bf16.mxu0 %v348
    %476 = vmatpush1.bf16.msra.mxu0 %v347
    %477 = vmatprep.subr.bf16.mxu0 %v350
    %478 = vmatpush1.bf16.msra.mxu0 %v349
    %479 = vmatprep.subr.bf16.mxu0 %v352
    %480 = vmatpush1.bf16.msra.mxu0 %v351
    %481 = vmatprep.subr.bf16.mxu0 %v354
    %482 = vmatpush1.bf16.msra.mxu0 %v353
    %483 = vmatprep.mubr.bf16.mxu0 %v52
    %484 = vmatmul.mubr.bf16.gmra.mrb[0].mxu0 %v51
    %v485 = vpop.f32.mrb[0].mxu0
    %v486 = vadd.f32 %v124, %v485
    %v487 = vpop.f32.mrb[0].mxu0
    %v488 = vadd.f32 %v128, %v487
    %v489 = vpop.f32.mrb[0].mxu0
    %v490 = vadd.f32 %v124, %v489
    %v491 = vpop.f32.mrb[0].mxu0
    %v492 = vadd.f32 %v128, %v491
    %493 = vdwg.mxu0
    %494 = vmatprep.subr.bf16.mxu0 %v356
    %495 = vmatpush1.bf16.msra.mxu0 %v355
    %496 = vmatprep.subr.bf16.mxu0 %v358
    %497 = vmatpush1.bf16.msra.mxu0 %v357
    %498 = vmatprep.subr.bf16.mxu0 %v360
    %499 = vmatpush1.bf16.msra.mxu0 %v359
    %500 = vmatprep.subr.bf16.mxu0 %v362
    %501 = vmatpush1.bf16.msra.mxu0 %v361
    %502 = vmatprep.subr.bf16.mxu0 %v364
    %503 = vmatpush1.bf16.msra.mxu0 %v363
    %504 = vmatprep.subr.bf16.mxu0 %v366
    %505 = vmatpush1.bf16.msra.mxu0 %v365
    %506 = vmatprep.subr.bf16.mxu0 %v368
    %507 = vmatpush1.bf16.msra.mxu0 %v367
    %508 = vmatprep.subr.bf16.mxu0 %v370
    %509 = vmatpush1.bf16.msra.mxu0 %v369
    %510 = vmatprep.subr.bf16.mxu0 %v372
    %511 = vmatpush1.bf16.msra.mxu0 %v371
    %512 = vmatprep.subr.bf16.mxu0 %v374
    %513 = vmatpush1.bf16.msra.mxu0 %v373
    %514 = vmatprep.subr.bf16.mxu0 %v376
    %515 = vmatpush1.bf16.msra.mxu0 %v375
    %516 = vmatprep.subr.bf16.mxu0 %v378
    %517 = vmatpush1.bf16.msra.mxu0 %v377
    %518 = vmatprep.subr.bf16.mxu0 %v380
    %519 = vmatpush1.bf16.msra.mxu0 %v379
    %520 = vmatprep.subr.bf16.mxu0 %v382
    %521 = vmatpush1.bf16.msra.mxu0 %v381
    %522 = vmatprep.subr.bf16.mxu0 %v384
    %523 = vmatpush1.bf16.msra.mxu0 %v383
    %524 = vmatprep.subr.bf16.mxu0 %v386
    %525 = vmatpush1.bf16.msra.mxu0 %v385
    %526 = vmatprep.mubr.bf16.mxu0 %v54
    %527 = vmatmul.mubr.bf16.gmra.mrb[0].mxu0 %v53
    %v528 = vpop.f32.mrb[0].mxu0
    %v529 = vadd.f32 %v486, %v528
    %v530 = vpop.f32.mrb[0].mxu0
    %v531 = vadd.f32 %v488, %v530
    %v532 = vpop.f32.mrb[0].mxu0
    %v533 = vadd.f32 %v490, %v532
    %v534 = vpop.f32.mrb[0].mxu0
    %v535 = vadd.f32 %v492, %v534
    %536 = vdwg.mxu0
    %537 = vst [vmem:[#allocation7] sm:$0xff] %v529
    %538 = vst [vmem:[#allocation7 + $0x8] sm:$0xff] %v531
    %539 = vst [vmem:[#allocation7 + $0x10] sm:$0xff] %v533
    %540 = vst [vmem:[#allocation7 + $0x18] sm:$0xff] %v535
    // Predicated region
    $region22: #{tpu_custom_call.1} parent=1 // pred_check
      _
    $region23: #{tpu_custom_call.1} parent=1 // pred_check_branch
      %542 = sbr.rel (0) target = $region25
    $region24: #{tpu_custom_call.1} parent=1 // pred_region
      %s544 = ssub.s32 512, 512
      %545 = vsyncadd [#allocation4], %s544
      %s546 = sshll.u32 [#allocation7], 4
      %s547 = int_to_ptr.vmem [resolvable:$true] %s546
      %552 = dma.vmem_to_hbm [thread:$0]  %s547, 512, %s3, [#allocation4], 256, 256, 16
    $region25: #{tpu_custom_call.1} parent=1 // pred_fallthru
      _
    // Predicated region
    $region26: #{tpu_custom_call.1} parent=1 // pred_check
      _
    $region27: #{tpu_custom_call.1} parent=1 // pred_check_branch
      %554 = sbr.rel (0) target = $region29
    $region28: #{tpu_custom_call.1} parent=1 // pred_region
      %555 = dma.done [#allocation4], 512
    $region29: #{tpu_custom_call.1} parent=1 // pred_fallthru
      _
    %556 = vsyncpa [#allocation3], 1
    %557 = vsyncpa [#allocation6], 1
    %558 = vsyncpa [#allocation4], 1

</llo_original>
